<compile_context>
chip_gen: v6e
topology: v6e:2x2x1
jax: 0.10.0
libtpu: 0.0.40
codegen_flags: <defaults>
</compile_context>

<pallas_src>
import math

import jax
import jax.numpy as jnp
from jax.experimental import pallas as pl
from jax.experimental.pallas import tpu as pltpu


def _round_up(x, m):
    return ((x + m - 1) // m) * m


def _cdiv(a, b):
    return -(-a // b)


# --------------------------------------------------------------------------
# Kernel factory: fused MLP over per-chunk inputs
#   q = (relu(relu(sum_i x_i @ W1_i + B1) @ W2 + B2)) @ W3 + B3
# --------------------------------------------------------------------------
def _make_mlp_kernel(n_chunks):
    def kernel(*refs):
        x_refs = refs[:n_chunks]
        w1_refs = refs[n_chunks:2 * n_chunks]
        b1_ref, w2_ref, b2_ref, w3_ref, b3_ref, q_ref = refs[2 * n_chunks:]
        cd = w2_ref.dtype

        # Layer 1: per-chunk partial matmuls accumulated in f32 (concat-free).
        acc = jnp.dot(x_refs[0][...].astype(cd), w1_refs[0][...],
                      preferred_element_type=jnp.float32)
        for i in range(1, n_chunks):
            acc = acc + jnp.dot(x_refs[i][...].astype(cd), w1_refs[i][...],
                                preferred_element_type=jnp.float32)
        h = jnp.maximum(acc + b1_ref[...], 0.0).astype(cd)

        # Layer 2
        h = jnp.dot(h, w2_ref[...], preferred_element_type=jnp.float32) + b2_ref[...]
        h = jnp.maximum(h, 0.0).astype(cd)

        # Layer 3
        q = jnp.dot(h, w3_ref[...], preferred_element_type=jnp.float32) + b3_ref[...]
        q_ref[...] = q.astype(q_ref.dtype)

    return kernel


# --------------------------------------------------------------------------
# Parameter init (mirrors the PyTorch module) and one-time packing
# --------------------------------------------------------------------------
def init_critic_params(key, state_dim, action_dim, hidden1_dim, hidden2_dim,
                       init_w=0.003):
    """PyTorch-style params: weights [in, out] (transposed vs torch), biases [1, out]."""
    in_dim = state_dim + action_dim

    def linear_default(k, fan_in, fan_out):
        kw, kb = jax.random.split(k)
        bound = 1.0 / math.sqrt(fan_in)
        w = jax.random.uniform(kw, (fan_in, fan_out), jnp.float32, -bound, bound)
        b = jax.random.uniform(kb, (1, fan_out), jnp.float32, -bound, bound)
        return w, b

    def linear_small(k, fan_in, fan_out, w_lim):
        kw, kb = jax.random.split(k)
        w = jax.random.uniform(kw, (fan_in, fan_out), jnp.float32, -w_lim, w_lim)
        b = jax.random.uniform(kb, (1, fan_out), jnp.float32, -w_lim, w_lim)
        return w, b

    keys = jax.random.split(key, 6)
    w1, b1 = linear_default(keys[0], in_dim, hidden1_dim)
    w2, b2 = linear_default(keys[1], hidden1_dim, hidden2_dim)
    w3, b3 = linear_small(keys[2], hidden2_dim, 1, init_w)
    w4, b4 = linear_default(keys[3], in_dim, hidden1_dim)
    w5, b5 = linear_default(keys[4], hidden1_dim, hidden2_dim)
    w6, b6 = linear_small(keys[5], hidden2_dim, 1, init_w)

    return dict(w1=w1, b1=b1, w2=w2, b2=b2, w3=w3, b3=b3,
                w4=w4, b4=b4, w5=w5, b5=b5, w6=w6, b6=b6)


def _finalize_pack(W1, B1, W2, B2, W3, B3, chunk_dims, compute_dtype):
    """Split W1 into per-chunk row blocks and cast weights to compute_dtype."""
    assert W1.shape[0] == sum(chunk_dims), "chunk_dims must sum to state+action dim"
    blocks = []
    off = 0
    for d in chunk_dims:
        blocks.append(W1[off:off + d, :].astype(compute_dtype))
        off += d
    return dict(W1_blocks=tuple(blocks),
                B1=B1.astype(jnp.float32),
                W2=W2.astype(compute_dtype), B2=B2.astype(jnp.float32),
                W3=W3.astype(compute_dtype), B3=B3.astype(jnp.float32))


def pack_critic_params(p, chunk_dims, compute_dtype=jnp.bfloat16):
    """Twin-head fusion (done ONCE): W1=[w1|w4], W2/W3 block-diagonal, out dim 2."""
    h1 = p["w1"].shape[1]
    h2 = p["w2"].shape[1]

    W1 = jnp.concatenate([p["w1"], p["w4"]], axis=1)                 # [D_in, 2*h1]
    B1 = jnp.concatenate([p["b1"], p["b4"]], axis=1)                 # [1, 2*h1]

    W2 = jnp.zeros((2 * h1, 2 * h2), jnp.float32)                    # block-diag
    W2 = W2.at[:h1, :h2].set(p["w2"]).at[h1:, h2:].set(p["w5"])
    B2 = jnp.concatenate([p["b2"], p["b5"]], axis=1)                 # [1, 2*h2]

    W3 = jnp.zeros((2 * h2, 2), jnp.float32)                         # block-diag
    W3 = W3.at[:h2, 0:1].set(p["w3"]).at[h2:, 1:2].set(p["w6"])
    B3 = jnp.concatenate([p["b3"], p["b6"]], axis=1)                 # [1, 2]

    return _finalize_pack(W1, B1, W2, B2, W3, B3, chunk_dims, compute_dtype)


def pack_critic_q1_params(p, chunk_dims, compute_dtype=jnp.bfloat16):
    """Q1-only packing (actor-update path): half the matmul/DMA work."""
    return _finalize_pack(p["w1"], p["b1"], p["w2"], p["b2"], p["w3"], p["b3"],
                          chunk_dims, compute_dtype)


# --------------------------------------------------------------------------
# Forward wrappers
# --------------------------------------------------------------------------
def _packed_mlp_forward(packed, chunks, *, block_b=1024, vmem_limit_bytes=None):
    w1_blocks = packed["W1_blocks"]
    assert len(w1_blocks) == len(chunks), "chunk count must match pack chunk_dims"
    B = chunks[0].shape[0]
    n_out = packed["W3"].shape[1]

    # Batch tiling: TB multiple of 8; grid = cdiv(B, TB) with ragged last block
    # (no padding pass over HBM).  Guarantee >= 2 grid steps when B >= 16 so a
    # v7x megacore can split the "parallel" batch axis across both TCs.
    tb = min(max(8, _round_up(block_b, 8)), _round_up(B, 8))
    n_blocks = _cdiv(B, tb)
    if n_blocks < 2 and B >= 16:
        tb = _round_up(_cdiv(B, 2), 8)
        n_blocks = _cdiv(B, tb)
    grid = (n_blocks,)

    def tile_spec(d):
        return pl.BlockSpec((tb, d), lambda i: (i, 0))

    def resident(arr):
        # Full-array block, constant index map -> DMA'd once, stays VMEM-resident.
        return pl.BlockSpec(arr.shape, lambda i: (0, 0))

    in_specs = ([tile_spec(c.shape[1]) for c in chunks]
                + [resident(w) for w in w1_blocks]
                + [resident(packed[k]) for k in ("B1", "W2", "B2", "W3", "B3")])

    D = sum(c.shape[1] for c in chunks)
    n1 = packed["W2"].shape[0]
    n2 = packed["W2"].shape[1]
    flops = 2 * B * (D * n1 + n1 * n2 + n2 * n_out)
    param_bytes = sum(int(w.size) * w.dtype.itemsize for w in w1_blocks)
    param_bytes += sum(int(packed[k].size) * packed[k].dtype.itemsize
                       for k in ("B1", "W2", "B2", "W3", "B3"))
    bytes_accessed = int(sum(int(c.size) * c.dtype.itemsize for c in chunks)
                         + param_bytes + B * n_out * 4)

    cp_kwargs = dict(dimension_semantics=("parallel",))
    if vmem_limit_bytes is not None:
        cp_kwargs["vmem_limit_bytes"] = int(vmem_limit_bytes)

    q = pl.pallas_call(
        _make_mlp_kernel(len(chunks)),
        out_shape=jax.ShapeDtypeStruct((B, n_out), jnp.float32),
        grid=grid,
        in_specs=in_specs,
        out_specs=pl.BlockSpec((tb, n_out), lambda i: (i, 0)),
        compiler_params=pltpu.CompilerParams(**cp_kwargs),
        cost_estimate=pl.CostEstimate(flops=flops, transcendentals=0,
                                      bytes_accessed=bytes_accessed),
    )(*chunks, *w1_blocks, packed["B1"], packed["W2"], packed["B2"],
      packed["W3"], packed["B3"])
    return q


def critic_forward(fused, state_list, action_list, *, block_b=1024,
                   vmem_limit_bytes=None):
    """Pallas equivalent of Critic.forward(state, action) -> (q1, q2)."""
    chunks = list(state_list) + list(action_list)
    q = _packed_mlp_forward(fused, chunks, block_b=block_b,
                            vmem_limit_bytes=vmem_limit_bytes)
    return q[:, 0:1], q[:, 1:2]


def critic_q1(q1_packed, state_list, action_list, *, block_b=1024,
              vmem_limit_bytes=None):
    """Pallas equivalent of Critic.Q1 (single-head packed params; no wasted head-2 work)."""
    chunks = list(state_list) + list(action_list)
    return _packed_mlp_forward(q1_packed, chunks, block_b=block_b,
                               vmem_limit_bytes=vmem_limit_bytes)


# --------------------------------------------------------------------------
# Pure-JAX reference (unfused, mirrors the PyTorch module exactly)
# --------------------------------------------------------------------------
def critic_forward_ref(params, state_list, action_list):
    x = jnp.concatenate(
        [jnp.concatenate(state_list, axis=1),
         jnp.concatenate(action_list, axis=1)], axis=1).astype(jnp.float32)

    def head(w_a, b_a, w_b, b_b, w_c, b_c):
        h = jnp.maximum(jnp.dot(x, w_a, precision="highest") + b_a, 0.0)
        h = jnp.maximum(jnp.dot(h, w_b, precision="highest") + b_b, 0.0)
        return jnp.dot(h, w_c, precision="highest") + b_c

    q1 = head(params["w1"], params["b1"], params["w2"], params["b2"],
              params["w3"], params["b3"])
    q2 = head(params["w4"], params["b4"], params["w5"], params["b5"],
              params["w6"], params["b6"])
    return q1, q2


if __name__ == "__main__":
    # Small MATD3-style problem: 2 agents, each with its own state/action chunk.
    state_dims = (6, 6)      # per-agent state dims  -> state_dim = 12
    action_dims = (2, 2)     # per-agent action dims -> action_dim = 4
    chunk_dims = tuple(state_dims) + tuple(action_dims)
    state_dim = sum(state_dims)
    action_dim = sum(action_dims)
    hidden1_dim = 32
    hidden2_dim = 32

    key = jax.random.PRNGKey(0)
    k_params, k_data = jax.random.split(key)
    params = init_critic_params(k_params, state_dim, action_dim,
                                hidden1_dim, hidden2_dim)

    # One-time packing: f32 for bit-tight checks, bf16 (default) for training.
    fused_f32 = pack_critic_params(params, chunk_dims, compute_dtype=jnp.float32)
    fused_bf16 = pack_critic_params(params, chunk_dims)            # bf16 default
    q1_pack_f32 = pack_critic_q1_params(params, chunk_dims, compute_dtype=jnp.float32)

    def make_inputs(k, batch):
        ks = jax.random.split(k, len(state_dims) + len(action_dims))
        s = [jax.random.normal(ks[i], (batch, d), jnp.float32)
             for i, d in enumerate(state_dims)]
        a = [jax.random.normal(ks[len(state_dims) + i], (batch, d), jnp.float32)
             for i, d in enumerate(action_dims)]
        return s, a

    # --- small batch: single grid step, no split (B < 16) --------------------
    batch = 8
    state_list, action_list = make_inputs(k_data, batch)
    q1, q2 = critic_forward(fused_f32, state_list, action_list)
    jax.block_until_ready((q1, q2))
    q1_ref, q2_ref = critic_forward_ref(params, state_list, action_list)
    assert q1.shape == (batch, 1) and q2.shape == (batch, 1)
    assert jnp.allclose(q1, q1_ref, atol=2e-5, rtol=1e-4)
    assert jnp.allclose(q2, q2_ref, atol=2e-5, rtol=1e-4)

    # --- larger batch, explicit small tile: grid=(3,), ragged last block -----
    batch_big = 300
    k_big = jax.random.fold_in(k_data, 1)
    state_big, action_big = make_inputs(k_big, batch_big)
    q1b, q2b = critic_forward(fused_f32, state_big, action_big, block_b=128)
    jax.block_until_ready((q1b, q2b))
    q1b_ref, q2b_ref = critic_forward_ref(params, state_big, action_big)
    assert q1b.shape == (batch_big, 1) and q2b.shape == (batch_big, 1)
    assert jnp.allclose(q1b, q1b_ref, atol=2e-5, rtol=1e-4)
    assert jnp.allclose(q2b, q2b_ref, atol=2e-5, rtol=1e-4)

    # --- default tile: exercises the >=2-grid-step split (tb=152, grid=(2,)) -
    q1c, q2c = critic_forward(fused_f32, state_big, action_big)
    jax.block_until_ready((q1c, q2c))
    assert jnp.allclose(q1c, q1b_ref, atol=2e-5, rtol=1e-4)
    assert jnp.allclose(q2c, q2b_ref, atol=2e-5, rtol=1e-4)

    # --- bf16 compute path (training default): loose tolerance ---------------
    q1d, q2d = critic_forward(fused_bf16, state_big, action_big)
    jax.block_until_ready((q1d, q2d))
    assert jnp.allclose(q1d, q1b_ref, atol=1e-3, rtol=5e-2)
    assert jnp.allclose(q2d, q2b_ref, atol=1e-3, rtol=5e-2)

    # --- Q1-only path (Critic.Q1) with dedicated single-head packing ---------
    q1_only = critic_q1(q1_pack_f32, state_list, action_list)
    jax.block_until_ready(q1_only)
    assert q1_only.shape == (batch, 1)
    assert jnp.allclose(q1_only, q1_ref, atol=2e-5, rtol=1e-4)

    print("KERNEL_OK")
</pallas_src>

<mosaic_0001>
module attributes {stable_mosaic.version = 11 : i64} {
  func.func @kernel(%arg0: i32, %arg1: memref<8x6xf32, #tpu.memory_space<vmem>>, %arg2: memref<8x6xf32, #tpu.memory_space<vmem>>, %arg3: memref<8x2xf32, #tpu.memory_space<vmem>>, %arg4: memref<8x2xf32, #tpu.memory_space<vmem>>, %arg5: memref<6x64xf32, #tpu.memory_space<vmem>>, %arg6: memref<6x64xf32, #tpu.memory_space<vmem>>, %arg7: memref<2x64xf32, #tpu.memory_space<vmem>>, %arg8: memref<2x64xf32, #tpu.memory_space<vmem>>, %arg9: memref<1x64xf32, #tpu.memory_space<vmem>>, %arg10: memref<64x64xf32, #tpu.memory_space<vmem>>, %arg11: memref<1x64xf32, #tpu.memory_space<vmem>>, %arg12: memref<64x2xf32, #tpu.memory_space<vmem>>, %arg13: memref<1x2xf32, #tpu.memory_space<vmem>>, %arg14: memref<8x2xf32, #tpu.memory_space<vmem>>) attributes {dimension_semantics = [#tpu.dimension_semantics<parallel>], iteration_bounds = array<i64: 1>, scalar_prefetch = 0 : i64, scratch_operands = 0 : i64, tpu.core_type = #tpu.core_type<tc>, window_params = [{transform_indices = @transform_0, window_bounds = array<i64: 8, 6>}, {transform_indices = @transform_1, window_bounds = array<i64: 8, 6>}, {transform_indices = @transform_2, window_bounds = array<i64: 8, 2>}, {transform_indices = @transform_3, window_bounds = array<i64: 8, 2>}, {pipeline_mode = #tpu.pipeline_mode<synchronous>, transform_indices = @transform_4, window_bounds = array<i64: 6, 64>}, {pipeline_mode = #tpu.pipeline_mode<synchronous>, transform_indices = @transform_5, window_bounds = array<i64: 6, 64>}, {pipeline_mode = #tpu.pipeline_mode<synchronous>, transform_indices = @transform_6, window_bounds = array<i64: 2, 64>}, {pipeline_mode = #tpu.pipeline_mode<synchronous>, transform_indices = @transform_7, window_bounds = array<i64: 2, 64>}, {pipeline_mode = #tpu.pipeline_mode<synchronous>, transform_indices = @transform_8, window_bounds = array<i64: 1, 64>}, {pipeline_mode = #tpu.pipeline_mode<synchronous>, transform_indices = @transform_9, window_bounds = array<i64: 64, 64>}, {pipeline_mode = #tpu.pipeline_mode<synchronous>, transform_indices = @transform_10, window_bounds = array<i64: 1, 64>}, {pipeline_mode = #tpu.pipeline_mode<synchronous>, transform_indices = @transform_11, window_bounds = array<i64: 64, 2>}, {pipeline_mode = #tpu.pipeline_mode<synchronous>, transform_indices = @transform_12, window_bounds = array<i64: 1, 2>}, {transform_indices = @transform_13, window_bounds = array<i64: 8, 2>}]} {
    %c0 = arith.constant 0 : index
    %c0_0 = arith.constant 0 : index
    %0 = vector.load %arg1[%c0, %c0_0] : memref<8x6xf32, #tpu.memory_space<vmem>>, vector<8x6xf32>
    %c0_1 = arith.constant 0 : index
    %c0_2 = arith.constant 0 : index
    %1 = vector.load %arg5[%c0_1, %c0_2] : memref<6x64xf32, #tpu.memory_space<vmem>>, vector<6x64xf32>
    %cst = arith.constant dense<0.000000e+00> : vector<8x64xf32>
    %2 = tpu.matmul %0, %1, %cst {dimension_numbers = #tpu.dot_dimension_numbers<[1], [0], [0], [1], [0, 0, 1, 1], [], []>} : vector<8x6xf32>, vector<6x64xf32>, vector<8x64xf32> -> vector<8x64xf32>
    %c0_3 = arith.constant 0 : index
    %c0_4 = arith.constant 0 : index
    %3 = vector.load %arg2[%c0_3, %c0_4] : memref<8x6xf32, #tpu.memory_space<vmem>>, vector<8x6xf32>
    %c0_5 = arith.constant 0 : index
    %c0_6 = arith.constant 0 : index
    %4 = vector.load %arg6[%c0_5, %c0_6] : memref<6x64xf32, #tpu.memory_space<vmem>>, vector<6x64xf32>
    %cst_7 = arith.constant dense<0.000000e+00> : vector<8x64xf32>
    %5 = tpu.matmul %3, %4, %cst_7 {dimension_numbers = #tpu.dot_dimension_numbers<[1], [0], [0], [1], [0, 0, 1, 1], [], []>} : vector<8x6xf32>, vector<6x64xf32>, vector<8x64xf32> -> vector<8x64xf32>
    %6 = arith.addf %2, %5 : vector<8x64xf32>
    %c0_8 = arith.constant 0 : index
    %c0_9 = arith.constant 0 : index
    %7 = vector.load %arg3[%c0_8, %c0_9] : memref<8x2xf32, #tpu.memory_space<vmem>>, vector<8x2xf32>
    %c0_10 = arith.constant 0 : index
    %c0_11 = arith.constant 0 : index
    %8 = vector.load %arg7[%c0_10, %c0_11] : memref<2x64xf32, #tpu.memory_space<vmem>>, vector<2x64xf32>
    %cst_12 = arith.constant dense<0.000000e+00> : vector<8x64xf32>
    %9 = tpu.matmul %7, %8, %cst_12 {dimension_numbers = #tpu.dot_dimension_numbers<[1], [0], [0], [1], [0, 0, 1, 1], [], []>} : vector<8x2xf32>, vector<2x64xf32>, vector<8x64xf32> -> vector<8x64xf32>
    %10 = arith.addf %6, %9 : vector<8x64xf32>
    %c0_13 = arith.constant 0 : index
    %c0_14 = arith.constant 0 : index
    %11 = vector.load %arg4[%c0_13, %c0_14] : memref<8x2xf32, #tpu.memory_space<vmem>>, vector<8x2xf32>
    %c0_15 = arith.constant 0 : index
    %c0_16 = arith.constant 0 : index
    %12 = vector.load %arg8[%c0_15, %c0_16] : memref<2x64xf32, #tpu.memory_space<vmem>>, vector<2x64xf32>
    %cst_17 = arith.constant dense<0.000000e+00> : vector<8x64xf32>
    %13 = tpu.matmul %11, %12, %cst_17 {dimension_numbers = #tpu.dot_dimension_numbers<[1], [0], [0], [1], [0, 0, 1, 1], [], []>} : vector<8x2xf32>, vector<2x64xf32>, vector<8x64xf32> -> vector<8x64xf32>
    %14 = arith.addf %10, %13 : vector<8x64xf32>
    %c0_18 = arith.constant 0 : index
    %c0_19 = arith.constant 0 : index
    %15 = vector.load %arg9[%c0_18, %c0_19] : memref<1x64xf32, #tpu.memory_space<vmem>>, vector<1x64xf32>
    %16 = vector.broadcast %15 : vector<1x64xf32> to vector<8x64xf32>
    %17 = arith.addf %14, %16 : vector<8x64xf32>
    %cst_20 = arith.constant 0.000000e+00 : f32
    %18 = vector.broadcast %cst_20 : f32 to vector<8x64xf32>
    %19 = arith.maximumf %17, %18 : vector<8x64xf32>
    %c0_21 = arith.constant 0 : index
    %c0_22 = arith.constant 0 : index
    %20 = vector.load %arg10[%c0_21, %c0_22] : memref<64x64xf32, #tpu.memory_space<vmem>>, vector<64x64xf32>
    %cst_23 = arith.constant dense<0.000000e+00> : vector<8x64xf32>
    %21 = tpu.matmul %19, %20, %cst_23 {dimension_numbers = #tpu.dot_dimension_numbers<[1], [0], [0], [1], [0, 0, 1, 1], [], []>} : vector<8x64xf32>, vector<64x64xf32>, vector<8x64xf32> -> vector<8x64xf32>
    %c0_24 = arith.constant 0 : index
    %c0_25 = arith.constant 0 : index
    %22 = vector.load %arg11[%c0_24, %c0_25] : memref<1x64xf32, #tpu.memory_space<vmem>>, vector<1x64xf32>
    %23 = vector.broadcast %22 : vector<1x64xf32> to vector<8x64xf32>
    %24 = arith.addf %21, %23 : vector<8x64xf32>
    %cst_26 = arith.constant 0.000000e+00 : f32
    %25 = vector.broadcast %cst_26 : f32 to vector<8x64xf32>
    %26 = arith.maximumf %24, %25 : vector<8x64xf32>
    %c0_27 = arith.constant 0 : index
    %c0_28 = arith.constant 0 : index
    %27 = vector.load %arg12[%c0_27, %c0_28] : memref<64x2xf32, #tpu.memory_space<vmem>>, vector<64x2xf32>
    %cst_29 = arith.constant dense<0.000000e+00> : vector<8x2xf32>
    %28 = tpu.matmul %26, %27, %cst_29 {dimension_numbers = #tpu.dot_dimension_numbers<[1], [0], [0], [1], [0, 0, 1, 1], [], []>} : vector<8x64xf32>, vector<64x2xf32>, vector<8x2xf32> -> vector<8x2xf32>
    %c0_30 = arith.constant 0 : index
    %c0_31 = arith.constant 0 : index
    %29 = vector.load %arg13[%c0_30, %c0_31] : memref<1x2xf32, #tpu.memory_space<vmem>>, vector<1x2xf32>
    %30 = vector.broadcast %29 : vector<1x2xf32> to vector<8x2xf32>
    %31 = arith.addf %28, %30 : vector<8x2xf32>
    %c0_32 = arith.constant 0 : index
    %c0_33 = arith.constant 0 : index
    %32 = vector.load %arg14[%c0_32, %c0_33] : memref<8x2xf32, #tpu.memory_space<vmem>>, vector<8x2xf32>
    tpu.vector_store %arg14[%c0_32, %c0_33], %31 {strides = array<i32>} : memref<8x2xf32, #tpu.memory_space<vmem>>, vector<8x2xf32>,
    return
  }
  func.func @transform_0(%arg0: i32) -> (i32, i32) {
    %c0_i32 = arith.constant 0 : i32
    %c0_i32_0 = arith.constant 0 : i32
    return %arg0, %c0_i32 : i32, i32
  }
  func.func @transform_1(%arg0: i32) -> (i32, i32) {
    %c0_i32 = arith.constant 0 : i32
    %c0_i32_0 = arith.constant 0 : i32
    return %arg0, %c0_i32 : i32, i32
  }
  func.func @transform_2(%arg0: i32) -> (i32, i32) {
    %c0_i32 = arith.constant 0 : i32
    %c0_i32_0 = arith.constant 0 : i32
    return %arg0, %c0_i32 : i32, i32
  }
  func.func @transform_3(%arg0: i32) -> (i32, i32) {
    %c0_i32 = arith.constant 0 : i32
    %c0_i32_0 = arith.constant 0 : i32
    return %arg0, %c0_i32 : i32, i32
  }
  func.func @transform_4(%arg0: i32) -> (i32, i32) {
    %c0_i32 = arith.constant 0 : i32
    %c0_i32_0 = arith.constant 0 : i32
    %c0_i32_1 = arith.constant 0 : i32
    return %c0_i32, %c0_i32_0 : i32, i32
  }
  func.func @transform_5(%arg0: i32) -> (i32, i32) {
    %c0_i32 = arith.constant 0 : i32
    %c0_i32_0 = arith.constant 0 : i32
    %c0_i32_1 = arith.constant 0 : i32
    return %c0_i32, %c0_i32_0 : i32, i32
  }
  func.func @transform_6(%arg0: i32) -> (i32, i32) {
    %c0_i32 = arith.constant 0 : i32
    %c0_i32_0 = arith.constant 0 : i32
    %c0_i32_1 = arith.constant 0 : i32
    return %c0_i32, %c0_i32_0 : i32, i32
  }
  func.func @transform_7(%arg0: i32) -> (i32, i32) {
    %c0_i32 = arith.constant 0 : i32
    %c0_i32_0 = arith.constant 0 : i32
    %c0_i32_1 = arith.constant 0 : i32
    return %c0_i32, %c0_i32_0 : i32, i32
  }
  func.func @transform_8(%arg0: i32) -> (i32, i32) {
    %c0_i32 = arith.constant 0 : i32
    %c0_i32_0 = arith.constant 0 : i32
    %c0_i32_1 = arith.constant 0 : i32
    return %c0_i32, %c0_i32_0 : i32, i32
  }
  func.func @transform_9(%arg0: i32) -> (i32, i32) {
    %c0_i32 = arith.constant 0 : i32
    %c0_i32_0 = arith.constant 0 : i32
    %c0_i32_1 = arith.constant 0 : i32
    return %c0_i32, %c0_i32_0 : i32, i32
  }
  func.func @transform_10(%arg0: i32) -> (i32, i32) {
    %c0_i32 = arith.constant 0 : i32
    %c0_i32_0 = arith.constant 0 : i32
    %c0_i32_1 = arith.constant 0 : i32
    return %c0_i32, %c0_i32_0 : i32, i32
  }
  func.func @transform_11(%arg0: i32) -> (i32, i32) {
    %c0_i32 = arith.constant 0 : i32
    %c0_i32_0 = arith.constant 0 : i32
    %c0_i32_1 = arith.constant 0 : i32
    return %c0_i32, %c0_i32_0 : i32, i32
  }
  func.func @transform_12(%arg0: i32) -> (i32, i32) {
    %c0_i32 = arith.constant 0 : i32
    %c0_i32_0 = arith.constant 0 : i32
    %c0_i32_1 = arith.constant 0 : i32
    return %c0_i32, %c0_i32_0 : i32, i32
  }
  func.func @transform_13(%arg0: i32) -> (i32, i32) {
    %c0_i32 = arith.constant 0 : i32
    %c0_i32_0 = arith.constant 0 : i32
    return %arg0, %c0_i32 : i32, i32
  }
}

</mosaic_0001>

<llo_original>
// kernel: tpu_custom_call.1
$region0: #{tpu_custom_call.1}
  #allocation0 [shape = 'u32[]', space=smem, size = 0x4, offset = 0x4, fixed_abs, tag = 'smem constant byte address 0x4 - core index']
  #allocation1 [shape = 'u32[144,128]{1,0:T(1,128)}', space=vmem, size = 0x12000, scoped, tag = 'internal scratch']
  %s0 = inlined_call_operand.vmem [shape: f32[8,6], index: 0, kind: input, shape index: {}]
  %s1 = inlined_call_operand.vmem [shape: f32[8,6], index: 1, kind: input, shape index: {}]
  %s2 = inlined_call_operand.vmem [shape: f32[8,2], index: 2, kind: input, shape index: {}]
  %s3 = inlined_call_operand.vmem [shape: f32[8,2], index: 3, kind: input, shape index: {}]
  %s4 = inlined_call_operand.vmem [shape: f32[6,64], index: 4, kind: input, shape index: {}]
  %s5 = inlined_call_operand.vmem [shape: f32[6,64], index: 5, kind: input, shape index: {}]
  %s6 = inlined_call_operand.vmem [shape: f32[2,64], index: 6, kind: input, shape index: {}]
  %s7 = inlined_call_operand.vmem [shape: f32[2,64], index: 7, kind: input, shape index: {}]
  %s8 = inlined_call_operand.vmem [shape: f32[1,64], index: 8, kind: input, shape index: {}]
  %s9 = inlined_call_operand.vmem [shape: f32[64,64], index: 9, kind: input, shape index: {}]
  %s10 = inlined_call_operand.vmem [shape: f32[1,64], index: 10, kind: input, shape index: {}]
  %s11 = inlined_call_operand.vmem [shape: f32[64,2], index: 11, kind: input, shape index: {}]
  %s12 = inlined_call_operand.vmem [shape: f32[1,2], index: 12, kind: input, shape index: {}]
  %s13 = inlined_call_operand.vmem [shape: f32[8,2], index: 13, kind: output, shape index: {}]
  %s14 = sld [smem:[#allocation0]]
  $region62: #{tpu_custom_call.1} parent=0
    _
  %s16 = ssub.s32 1, %s14
  %s17 = scalar_select 0, %s16, %s14
  // Predicated region
  $region2: #{tpu_custom_call.1} parent=0 // pred_check
    _
  $region3: #{tpu_custom_call.1} parent=0 // pred_check_branch
    %19 = sbr.rel (0) target = $region5
  $region4: #{tpu_custom_call.1} parent=0 // pred_region
    _
  $region5: #{tpu_custom_call.1} parent=0 // pred_fallthru
    _
  // Predicated region
  $region6: #{tpu_custom_call.1} parent=0 // pred_check
    _
  $region7: #{tpu_custom_call.1} parent=0 // pred_check_branch
    %21 = sbr.rel (0) target = $region9
  $region8: #{tpu_custom_call.1} parent=0 // pred_region
    _
  $region9: #{tpu_custom_call.1} parent=0 // pred_fallthru
    _
  // Predicated region
  $region10: #{tpu_custom_call.1} parent=0 // pred_check
    _
  $region11: #{tpu_custom_call.1} parent=0 // pred_check_branch
    %23 = sbr.rel (0) target = $region13
  $region12: #{tpu_custom_call.1} parent=0 // pred_region
    _
  $region13: #{tpu_custom_call.1} parent=0 // pred_fallthru
    _
  // Predicated region
  $region14: #{tpu_custom_call.1} parent=0 // pred_check
    _
  $region15: #{tpu_custom_call.1} parent=0 // pred_check_branch
    %25 = sbr.rel (0) target = $region17
  $region16: #{tpu_custom_call.1} parent=0 // pred_region
    _
  $region17: #{tpu_custom_call.1} parent=0 // pred_fallthru
    _
  // Predicated region
  $region18: #{tpu_custom_call.1} parent=0 // pred_check
    _
  $region19: #{tpu_custom_call.1} parent=0 // pred_check_branch
    %27 = sbr.rel (0) target = $region21
  $region20: #{tpu_custom_call.1} parent=0 // pred_region
    _
  $region21: #{tpu_custom_call.1} parent=0 // pred_fallthru
    _
  // Predicated region
  $region22: #{tpu_custom_call.1} parent=0 // pred_check
    _
  $region23: #{tpu_custom_call.1} parent=0 // pred_check_branch
    %29 = sbr.rel (0) target = $region25
  $region24: #{tpu_custom_call.1} parent=0 // pred_region
    _
  $region25: #{tpu_custom_call.1} parent=0 // pred_fallthru
    _
  // Predicated region
  $region26: #{tpu_custom_call.1} parent=0 // pred_check
    _
  $region27: #{tpu_custom_call.1} parent=0 // pred_check_branch
    %31 = sbr.rel (0) target = $region29
  $region28: #{tpu_custom_call.1} parent=0 // pred_region
    _
  $region29: #{tpu_custom_call.1} parent=0 // pred_fallthru
    _
  // Predicated region
  $region30: #{tpu_custom_call.1} parent=0 // pred_check
    _
  $region31: #{tpu_custom_call.1} parent=0 // pred_check_branch
    %33 = sbr.rel (0) target = $region33
  $region32: #{tpu_custom_call.1} parent=0 // pred_region
    _
  $region33: #{tpu_custom_call.1} parent=0 // pred_fallthru
    _
  // Predicated region
  $region34: #{tpu_custom_call.1} parent=0 // pred_check
    _
  $region35: #{tpu_custom_call.1} parent=0 // pred_check_branch
    %35 = sbr.rel (0) target = $region37
  $region36: #{tpu_custom_call.1} parent=0 // pred_region
    _
  $region37: #{tpu_custom_call.1} parent=0 // pred_fallthru
    _
  // Predicated region
  $region38: #{tpu_custom_call.1} parent=0 // pred_check
    _
  $region39: #{tpu_custom_call.1} parent=0 // pred_check_branch
    %37 = sbr.rel (0) target = $region41
  $region40: #{tpu_custom_call.1} parent=0 // pred_region
    _
  $region41: #{tpu_custom_call.1} parent=0 // pred_fallthru
    _
  // Predicated region
  $region42: #{tpu_custom_call.1} parent=0 // pred_check
    _
  $region43: #{tpu_custom_call.1} parent=0 // pred_check_branch
    %39 = sbr.rel (0) target = $region45
  $region44: #{tpu_custom_call.1} parent=0 // pred_region
    _
  $region45: #{tpu_custom_call.1} parent=0 // pred_fallthru
    _
  // Predicated region
  $region46: #{tpu_custom_call.1} parent=0 // pred_check
    _
  $region47: #{tpu_custom_call.1} parent=0 // pred_check_branch
    %41 = sbr.rel (0) target = $region49
  $region48: #{tpu_custom_call.1} parent=0 // pred_region
    _
  $region49: #{tpu_custom_call.1} parent=0 // pred_fallthru
    _
  // Predicated region
  $region50: #{tpu_custom_call.1} parent=0 // pred_check
    _
  $region51: #{tpu_custom_call.1} parent=0 // pred_check_branch
    %43 = sbr.rel (0) target = $region53
  $region52: #{tpu_custom_call.1} parent=0 // pred_region
    _
  $region53: #{tpu_custom_call.1} parent=0 // pred_fallthru
    _
  %v44 = vld [vmem:[%s0] sm:$0xff]
  %v45 = vld [vmem:[%s4] sm:$0x3f]
  %v46 = vld [vmem:[%s1] sm:$0xff]
  %v47 = vld [vmem:[%s5] sm:$0x3f]
  %vm48 = vcmask 48128
  %v50 = vsel %vm48, %v46, 0
  %vm52 = vcmask 1045504
  %v54 = vsel %vm52, %v47, 0
  %56 = vmatprep.subr.mxu0 0.0
  %57 = vmatpush1.msra.mxu0 0.0
  %58 = vmatprep.subr.mxu0 0.0
  %59 = vmatpush1.msra.mxu0 0.0
  %60 = vmatprep.subr.mxu0 0.0
  %61 = vmatpush1.msra.mxu0 0.0
  %62 = vmatprep.subr.mxu0 0.0
  %63 = vmatpush1.msra.mxu0 0.0
  %64 = vmatprep.subr.mxu0 0.0
  %65 = vmatpush1.msra.mxu0 0.0
  %66 = vmatprep.subr.mxu0 0.0
  %67 = vmatpush1.msra.mxu0 0.0
  %68 = vmatprep.subr.mxu0 0.0
  %69 = vmatpush1.msra.mxu0 0.0
  %70 = vmatprep.subr.mxu0 0.0
  %71 = vmatpush1.msra.mxu0 0.0
  %72 = vmatprep.subr.mxu0 0.0
  %73 = vmatpush1.msra.mxu0 0.0
  %74 = vmatprep.subr.mxu0 0.0
  %75 = vmatpush1.msra.mxu0 0.0
  %76 = vmatprep.subr.mxu0 0.0
  %77 = vmatpush1.msra.mxu0 0.0
  %78 = vmatprep.subr.mxu0 0.0
  %79 = vmatpush1.msra.mxu0 0.0
  %80 = vmatprep.subr.mxu0 0.0
  %81 = vmatpush1.msra.mxu0 0.0
  %82 = vmatprep.subr.mxu0 0.0
  %83 = vmatpush1.msra.mxu0 0.0
  %84 = vmatprep.subr.mxu0 0.0
  %85 = vmatpush1.msra.mxu0 0.0
  %86 = vmatprep.subr.mxu0 0.0
  %87 = vmatpush1.msra.mxu0 %v54
  %88 = vmatprep.subr.mxu0 0.0
  %89 = vmatpush2.msra.mxu0 0.0
  %90 = vmatprep.subr.mxu0 0.0
  %91 = vmatpush2.msra.mxu0 0.0
  %92 = vmatprep.subr.mxu0 0.0
  %93 = vmatpush2.msra.mxu0 0.0
  %94 = vmatprep.subr.mxu0 0.0
  %95 = vmatpush2.msra.mxu0 0.0
  %96 = vmatprep.subr.mxu0 0.0
  %97 = vmatpush2.msra.mxu0 0.0
  %98 = vmatprep.subr.mxu0 0.0
  %99 = vmatpush2.msra.mxu0 0.0
  %100 = vmatprep.subr.mxu0 0.0
  %101 = vmatpush2.msra.mxu0 0.0
  %102 = vmatprep.subr.mxu0 0.0
  %103 = vmatpush2.msra.mxu0 0.0
  %104 = vmatprep.subr.mxu0 0.0
  %105 = vmatpush2.msra.mxu0 0.0
  %106 = vmatprep.subr.mxu0 0.0
  %107 = vmatpush2.msra.mxu0 0.0
  %108 = vmatprep.subr.mxu0 0.0
  %109 = vmatpush2.msra.mxu0 0.0
  %110 = vmatprep.subr.mxu0 0.0
  %111 = vmatpush2.msra.mxu0 0.0
  %112 = vmatprep.subr.mxu0 0.0
  %113 = vmatpush2.msra.mxu0 0.0
  %114 = vmatprep.subr.mxu0 0.0
  %115 = vmatpush2.msra.mxu0 0.0
  %116 = vmatprep.subr.mxu0 0.0
  %117 = vmatpush2.msra.mxu0 0.0
  %118 = vmatprep.subr.mxu0 0.0
  %119 = vmatpush2.msra.mxu0 0.0
  %120 = vmatprep.mubr.f32.mxu0 0.0
  %121 = vmatmul.mubr.f32.gmra.mxu0 %v50
  %v122 = vpop.f32.mrf.mxu0
  %v123 = vadd.f32 0.0, %v122
  %v124 = vpop.f32.mrf.mxu0
  %125 = vdwg.mxu0
  %v127 = vsel %vm48, %v44, 0
  %v130 = vsel %vm52, %v45, 0
  %132 = vmatprep.subr.mxu0 0.0
  %133 = vmatpush1.msra.mxu0 0.0
  %134 = vmatprep.subr.mxu0 0.0
  %135 = vmatpush1.msra.mxu0 0.0
  %136 = vmatprep.subr.mxu0 0.0
  %137 = vmatpush1.msra.mxu0 0.0
  %138 = vmatprep.subr.mxu0 0.0
  %139 = vmatpush1.msra.mxu0 0.0
  %140 = vmatprep.subr.mxu0 0.0
  %141 = vmatpush1.msra.mxu0 0.0
  %142 = vmatprep.subr.mxu0 0.0
  %143 = vmatpush1.msra.mxu0 0.0
  %144 = vmatprep.subr.mxu0 0.0
  %145 = vmatpush1.msra.mxu0 0.0
  %146 = vmatprep.subr.mxu0 0.0
  %147 = vmatpush1.msra.mxu0 0.0
  %148 = vmatprep.subr.mxu0 0.0
  %149 = vmatpush1.msra.mxu0 0.0
  %150 = vmatprep.subr.mxu0 0.0
  %151 = vmatpush1.msra.mxu0 0.0
  %152 = vmatprep.subr.mxu0 0.0
  %153 = vmatpush1.msra.mxu0 0.0
  %154 = vmatprep.subr.mxu0 0.0
  %155 = vmatpush1.msra.mxu0 0.0
  %156 = vmatprep.subr.mxu0 0.0
  %157 = vmatpush1.msra.mxu0 0.0
  %158 = vmatprep.subr.mxu0 0.0
  %159 = vmatpush1.msra.mxu0 0.0
  %160 = vmatprep.subr.mxu0 0.0
  %161 = vmatpush1.msra.mxu0 0.0
  %162 = vmatprep.subr.mxu0 0.0
  %163 = vmatpush1.msra.mxu0 %v130
  %164 = vmatprep.subr.mxu0 0.0
  %165 = vmatpush2.msra.mxu0 0.0
  %166 = vmatprep.subr.mxu0 0.0
  %167 = vmatpush2.msra.mxu0 0.0
  %168 = vmatprep.subr.mxu0 0.0
  %169 = vmatpush2.msra.mxu0 0.0
  %170 = vmatprep.subr.mxu0 0.0
  %171 = vmatpush2.msra.mxu0 0.0
  %172 = vmatprep.subr.mxu0 0.0
  %173 = vmatpush2.msra.mxu0 0.0
  %174 = vmatprep.subr.mxu0 0.0
  %175 = vmatpush2.msra.mxu0 0.0
  %176 = vmatprep.subr.mxu0 0.0
  %177 = vmatpush2.msra.mxu0 0.0
  %178 = vmatprep.subr.mxu0 0.0
  %179 = vmatpush2.msra.mxu0 0.0
  %180 = vmatprep.subr.mxu0 0.0
  %181 = vmatpush2.msra.mxu0 0.0
  %182 = vmatprep.subr.mxu0 0.0
  %183 = vmatpush2.msra.mxu0 0.0
  %184 = vmatprep.subr.mxu0 0.0
  %185 = vmatpush2.msra.mxu0 0.0
  %186 = vmatprep.subr.mxu0 0.0
  %187 = vmatpush2.msra.mxu0 0.0
  %188 = vmatprep.subr.mxu0 0.0
  %189 = vmatpush2.msra.mxu0 0.0
  %190 = vmatprep.subr.mxu0 0.0
  %191 = vmatpush2.msra.mxu0 0.0
  %192 = vmatprep.subr.mxu0 0.0
  %193 = vmatpush2.msra.mxu0 0.0
  %194 = vmatprep.subr.mxu0 0.0
  %195 = vmatpush2.msra.mxu0 0.0
  %196 = vmatprep.mubr.f32.mxu0 0.0
  %197 = vmatmul.mubr.f32.gmra.mxu0 %v127
  %v198 = vpop.f32.mrf.mxu0
  %v199 = vadd.f32 %v123, %v198
  %v200 = vpop.f32.mrf.mxu0
  %201 = vdwg.mxu0
  %v202 = vld [vmem:[%s2] sm:$0xff]
  %v203 = vld [vmem:[%s6] sm:$0x3]
  %vm204 = vcmask 15360
  %v206 = vsel %vm204, %v202, 0
  %vm208 = vcmask 1041408
  %v210 = vsel %vm208, %v203, 0
  %212 = vmatprep.subr.mxu0 0.0
  %213 = vmatpush1.msra.mxu0 0.0
  %214 = vmatprep.subr.mxu0 0.0
  %215 = vmatpush1.msra.mxu0 0.0
  %216 = vmatprep.subr.mxu0 0.0
  %217 = vmatpush1.msra.mxu0 0.0
  %218 = vmatprep.subr.mxu0 0.0
  %219 = vmatpush1.msra.mxu0 0.0
  %220 = vmatprep.subr.mxu0 0.0
  %221 = vmatpush1.msra.mxu0 0.0
  %222 = vmatprep.subr.mxu0 0.0
  %223 = vmatpush1.msra.mxu0 0.0
  %224 = vmatprep.subr.mxu0 0.0
  %225 = vmatpush1.msra.mxu0 0.0
  %226 = vmatprep.subr.mxu0 0.0
  %227 = vmatpush1.msra.mxu0 0.0
  %228 = vmatprep.subr.mxu0 0.0
  %229 = vmatpush1.msra.mxu0 0.0
  %230 = vmatprep.subr.mxu0 0.0
  %231 = vmatpush1.msra.mxu0 0.0
  %232 = vmatprep.subr.mxu0 0.0
  %233 = vmatpush1.msra.mxu0 0.0
  %234 = vmatprep.subr.mxu0 0.0
  %235 = vmatpush1.msra.mxu0 0.0
  %236 = vmatprep.subr.mxu0 0.0
  %237 = vmatpush1.msra.mxu0 0.0
  %238 = vmatprep.subr.mxu0 0.0
  %239 = vmatpush1.msra.mxu0 0.0
  %240 = vmatprep.subr.mxu0 0.0
  %241 = vmatpush1.msra.mxu0 0.0
  %242 = vmatprep.subr.mxu0 0.0
  %243 = vmatpush1.msra.mxu0 %v210
  %244 = vmatprep.subr.mxu0 0.0
  %245 = vmatpush2.msra.mxu0 0.0
  %246 = vmatprep.subr.mxu0 0.0
  %247 = vmatpush2.msra.mxu0 0.0
  %248 = vmatprep.subr.mxu0 0.0
  %249 = vmatpush2.msra.mxu0 0.0
  %250 = vmatprep.subr.mxu0 0.0
  %251 = vmatpush2.msra.mxu0 0.0
  %252 = vmatprep.subr.mxu0 0.0
  %253 = vmatpush2.msra.mxu0 0.0
  %254 = vmatprep.subr.mxu0 0.0
  %255 = vmatpush2.msra.mxu0 0.0
  %256 = vmatprep.subr.mxu0 0.0
  %257 = vmatpush2.msra.mxu0 0.0
  %258 = vmatprep.subr.mxu0 0.0
  %259 = vmatpush2.msra.mxu0 0.0
  %260 = vmatprep.subr.mxu0 0.0
  %261 = vmatpush2.msra.mxu0 0.0
  %262 = vmatprep.subr.mxu0 0.0
  %263 = vmatpush2.msra.mxu0 0.0
  %264 = vmatprep.subr.mxu0 0.0
  %265 = vmatpush2.msra.mxu0 0.0
  %266 = vmatprep.subr.mxu0 0.0
  %267 = vmatpush2.msra.mxu0 0.0
  %268 = vmatprep.subr.mxu0 0.0
  %269 = vmatpush2.msra.mxu0 0.0
  %270 = vmatprep.subr.mxu0 0.0
  %271 = vmatpush2.msra.mxu0 0.0
  %272 = vmatprep.subr.mxu0 0.0
  %273 = vmatpush2.msra.mxu0 0.0
  %274 = vmatprep.subr.mxu0 0.0
  %275 = vmatpush2.msra.mxu0 0.0
  %276 = vmatprep.mubr.f32.mxu0 0.0
  %277 = vmatmul.mubr.f32.gmra.mxu0 %v206
  %v278 = vpop.f32.mrf.mxu0
  %v279 = vadd.f32 0.0, %v278
  %v280 = vpop.f32.mrf.mxu0
  %281 = vdwg.mxu0
  %v282 = vadd.f32 %v199, %v279
  %v283 = vld [vmem:[%s3] sm:$0xff]
  %v284 = vld [vmem:[%s7] sm:$0x3]
  %v286 = vsel %vm204, %v283, 0
  %v289 = vsel %vm208, %v284, 0
  %291 = vmatprep.subr.mxu0 0.0
  %292 = vmatpush1.msra.mxu0 0.0
  %293 = vmatprep.subr.mxu0 0.0
  %294 = vmatpush1.msra.mxu0 0.0
  %295 = vmatprep.subr.mxu0 0.0
  %296 = vmatpush1.msra.mxu0 0.0
  %297 = vmatprep.subr.mxu0 0.0
  %298 = vmatpush1.msra.mxu0 0.0
  %299 = vmatprep.subr.mxu0 0.0
  %300 = vmatpush1.msra.mxu0 0.0
  %301 = vmatprep.subr.mxu0 0.0
  %302 = vmatpush1.msra.mxu0 0.0
  %303 = vmatprep.subr.mxu0 0.0
  %304 = vmatpush1.msra.mxu0 0.0
  %305 = vmatprep.subr.mxu0 0.0
  %306 = vmatpush1.msra.mxu0 0.0
  %307 = vmatprep.subr.mxu0 0.0
  %308 = vmatpush1.msra.mxu0 0.0
  %309 = vmatprep.subr.mxu0 0.0
  %310 = vmatpush1.msra.mxu0 0.0
  %311 = vmatprep.subr.mxu0 0.0
  %312 = vmatpush1.msra.mxu0 0.0
  %313 = vmatprep.subr.mxu0 0.0
  %314 = vmatpush1.msra.mxu0 0.0
  %315 = vmatprep.subr.mxu0 0.0
  %316 = vmatpush1.msra.mxu0 0.0
  %317 = vmatprep.subr.mxu0 0.0
  %318 = vmatpush1.msra.mxu0 0.0
  %319 = vmatprep.subr.mxu0 0.0
  %320 = vmatpush1.msra.mxu0 0.0
  %321 = vmatprep.subr.mxu0 0.0
  %322 = vmatpush1.msra.mxu0 %v289
  %323 = vmatprep.subr.mxu0 0.0
  %324 = vmatpush2.msra.mxu0 0.0
  %325 = vmatprep.subr.mxu0 0.0
  %326 = vmatpush2.msra.mxu0 0.0
  %327 = vmatprep.subr.mxu0 0.0
  %328 = vmatpush2.msra.mxu0 0.0
  %329 = vmatprep.subr.mxu0 0.0
  %330 = vmatpush2.msra.mxu0 0.0
  %331 = vmatprep.subr.mxu0 0.0
  %332 = vmatpush2.msra.mxu0 0.0
  %333 = vmatprep.subr.mxu0 0.0
  %334 = vmatpush2.msra.mxu0 0.0
  %335 = vmatprep.subr.mxu0 0.0
  %336 = vmatpush2.msra.mxu0 0.0
  %337 = vmatprep.subr.mxu0 0.0
  %338 = vmatpush2.msra.mxu0 0.0
  %339 = vmatprep.subr.mxu0 0.0
  %340 = vmatpush2.msra.mxu0 0.0
  %341 = vmatprep.subr.mxu0 0.0
  %342 = vmatpush2.msra.mxu0 0.0
  %343 = vmatprep.subr.mxu0 0.0
  %344 = vmatpush2.msra.mxu0 0.0
  %345 = vmatprep.subr.mxu0 0.0
  %346 = vmatpush2.msra.mxu0 0.0
  %347 = vmatprep.subr.mxu0 0.0
  %348 = vmatpush2.msra.mxu0 0.0
  %349 = vmatprep.subr.mxu0 0.0
  %350 = vmatpush2.msra.mxu0 0.0
  %351 = vmatprep.subr.mxu0 0.0
  %352 = vmatpush2.msra.mxu0 0.0
  %353 = vmatprep.subr.mxu0 0.0
  %354 = vmatpush2.msra.mxu0 0.0
  %355 = vmatprep.mubr.f32.mxu0 0.0
  %356 = vmatmul.mubr.f32.gmra.mxu0 %v286
  %v357 = vpop.f32.mrf.mxu0
  %v358 = vadd.f32 0.0, %v357
  %v359 = vpop.f32.mrf.mxu0
  %360 = vdwg.mxu0
  %v361 = vadd.f32 %v282, %v358
  %v362 = vld [vmem:[%s8] sm:$0x1]
  %v364 = vlaneseq
  %v365 = vshrl.u32 %v364, 7
  %v366 = vsub.s32 0, %v365
  %v367 = vrot.slane %v362, %v366
  %v369 = vadd.f32 %v361, %v367
  %v370 = vmax.f32 %v369, 0.0
  %v371 = vld [vmem:[%s9] sm:$0xff]
  %v372 = vld [vmem:[%s9 + $0x8] sm:$0xff]
  %v373 = vld [vmem:[%s9 + $0x10] sm:$0xff]
  %v374 = vld [vmem:[%s9 + $0x18] sm:$0xff]
  %v375 = vld [vmem:[%s9 + $0x20] sm:$0xff]
  %v376 = vld [vmem:[%s9 + $0x28] sm:$0xff]
  %v377 = vld [vmem:[%s9 + $0x30] sm:$0xff]
  %v378 = vld [vmem:[%s9 + $0x38] sm:$0xff]
  %v379 = vld [vmem:[%s10] sm:$0x1]
  %v381 = vlaneseq
  %v382 = vshrl.u32 %v381, 7
  %v383 = vsub.s32 0, %v382
  %v384 = vrot.slane %v379, %v383
  %vm386 = vcmask 523264
  %v388 = vsel %vm386, %v370, 0
  %390 = vmatprep.subr.mxu0 0.0
  %391 = vmatpush1.msra.mxu0 0.0
  %392 = vmatprep.subr.mxu0 0.0
  %393 = vmatpush1.msra.mxu0 0.0
  %394 = vmatprep.subr.mxu0 0.0
  %395 = vmatpush1.msra.mxu0 0.0
  %396 = vmatprep.subr.mxu0 0.0
  %397 = vmatpush1.msra.mxu0 0.0
  %398 = vmatprep.subr.mxu0 0.0
  %399 = vmatpush1.msra.mxu0 0.0
  %400 = vmatprep.subr.mxu0 0.0
  %401 = vmatpush1.msra.mxu0 0.0
  %402 = vmatprep.subr.mxu0 0.0
  %403 = vmatpush1.msra.mxu0 0.0
  %404 = vmatprep.subr.mxu0 0.0
  %405 = vmatpush1.msra.mxu0 0.0
  %406 = vmatprep.subr.mxu0 0.0
  %407 = vmatpush1.msra.mxu0 %v378
  %408 = vmatprep.subr.mxu0 0.0
  %409 = vmatpush1.msra.mxu0 %v377
  %410 = vmatprep.subr.mxu0 0.0
  %411 = vmatpush1.msra.mxu0 %v376
  %412 = vmatprep.subr.mxu0 0.0
  %413 = vmatpush1.msra.mxu0 %v375
  %414 = vmatprep.subr.mxu0 0.0
  %415 = vmatpush1.msra.mxu0 %v374
  %416 = vmatprep.subr.mxu0 0.0
  %417 = vmatpush1.msra.mxu0 %v373
  %418 = vmatprep.subr.mxu0 0.0
  %419 = vmatpush1.msra.mxu0 %v372
  %420 = vmatprep.subr.mxu0 0.0
  %421 = vmatpush1.msra.mxu0 %v371
  %422 = vmatprep.subr.mxu0 0.0
  %423 = vmatpush2.msra.mxu0 0.0
  %424 = vmatprep.subr.mxu0 0.0
  %425 = vmatpush2.msra.mxu0 0.0
  %426 = vmatprep.subr.mxu0 0.0
  %427 = vmatpush2.msra.mxu0 0.0
  %428 = vmatprep.subr.mxu0 0.0
  %429 = vmatpush2.msra.mxu0 0.0
  %430 = vmatprep.subr.mxu0 0.0
  %431 = vmatpush2.msra.mxu0 0.0
  %432 = vmatprep.subr.mxu0 0.0
  %433 = vmatpush2.msra.mxu0 0.0
  %434 = vmatprep.subr.mxu0 0.0
  %435 = vmatpush2.msra.mxu0 0.0
  %436 = vmatprep.subr.mxu0 0.0
  %437 = vmatpush2.msra.mxu0 0.0
  %438 = vmatprep.subr.mxu0 0.0
  %439 = vmatpush2.msra.mxu0 0.0
  %440 = vmatprep.subr.mxu0 0.0
  %441 = vmatpush2.msra.mxu0 0.0
  %442 = vmatprep.subr.mxu0 0.0
  %443 = vmatpush2.msra.mxu0 0.0
  %444 = vmatprep.subr.mxu0 0.0
  %445 = vmatpush2.msra.mxu0 0.0
  %446 = vmatprep.subr.mxu0 0.0
  %447 = vmatpush2.msra.mxu0 0.0
  %448 = vmatprep.subr.mxu0 0.0
  %449 = vmatpush2.msra.mxu0 0.0
  %450 = vmatprep.subr.mxu0 0.0
  %451 = vmatpush2.msra.mxu0 0.0
  %452 = vmatprep.subr.mxu0 0.0
  %453 = vmatpush2.msra.mxu0 0.0
  %454 = vmatprep.mubr.f32.mxu0 0.0
  %455 = vmatmul.mubr.f32.gmra.mxu0 %v388
  %v456 = vpop.f32.mrf.mxu0
  %v457 = vadd.f32 %v384, %v456
  %v458 = vpop.f32.mrf.mxu0
  %459 = vdwg.mxu0
  %v460 = vmax.f32 %v457, 0.0
  %v461 = vld [vmem:[%s11] sm:$0xff]
  %v462 = vld [vmem:[%s11 + $0x8] sm:$0xff]
  %v463 = vld [vmem:[%s11 + $0x10] sm:$0xff]
  %v464 = vld [vmem:[%s11 + $0x18] sm:$0xff]
  %v465 = vld [vmem:[%s11 + $0x20] sm:$0xff]
  %v466 = vld [vmem:[%s11 + $0x28] sm:$0xff]
  %v467 = vld [vmem:[%s11 + $0x30] sm:$0xff]
  %v468 = vld [vmem:[%s11 + $0x38] sm:$0xff]
  %v469 = vld [vmem:[%s12] sm:$0x1]
  %v471 = vlaneseq
  %v472 = vshrl.u32 %v471, 7
  %v473 = vsub.s32 0, %v472
  %v474 = vrot.slane %v469, %v473
  %v477 = vsel %vm386, %v460, 0
  %479 = vmatprep.subr.mxu0 0.0
  %480 = vmatpush1.msra.mxu0 0.0
  %481 = vmatprep.subr.mxu0 0.0
  %482 = vmatpush1.msra.mxu0 0.0
  %483 = vmatprep.subr.mxu0 0.0
  %484 = vmatpush1.msra.mxu0 0.0
  %485 = vmatprep.subr.mxu0 0.0
  %486 = vmatpush1.msra.mxu0 0.0
  %487 = vmatprep.subr.mxu0 0.0
  %488 = vmatpush1.msra.mxu0 0.0
  %489 = vmatprep.subr.mxu0 0.0
  %490 = vmatpush1.msra.mxu0 0.0
  %491 = vmatprep.subr.mxu0 0.0
  %492 = vmatpush1.msra.mxu0 0.0
  %493 = vmatprep.subr.mxu0 0.0
  %494 = vmatpush1.msra.mxu0 0.0
  %495 = vmatprep.subr.mxu0 0.0
  %496 = vmatpush1.msra.mxu0 %v468
  %497 = vmatprep.subr.mxu0 0.0
  %498 = vmatpush1.msra.mxu0 %v467
  %499 = vmatprep.subr.mxu0 0.0
  %500 = vmatpush1.msra.mxu0 %v466
  %501 = vmatprep.subr.mxu0 0.0
  %502 = vmatpush1.msra.mxu0 %v465
  %503 = vmatprep.subr.mxu0 0.0
  %504 = vmatpush1.msra.mxu0 %v464
  %505 = vmatprep.subr.mxu0 0.0
  %506 = vmatpush1.msra.mxu0 %v463
  %507 = vmatprep.subr.mxu0 0.0
  %508 = vmatpush1.msra.mxu0 %v462
  %509 = vmatprep.subr.mxu0 0.0
  %510 = vmatpush1.msra.mxu0 %v461
  %511 = vmatprep.subr.mxu0 0.0
  %512 = vmatpush2.msra.mxu0 0.0
  %513 = vmatprep.subr.mxu0 0.0
  %514 = vmatpush2.msra.mxu0 0.0
  %515 = vmatprep.subr.mxu0 0.0
  %516 = vmatpush2.msra.mxu0 0.0
  %517 = vmatprep.subr.mxu0 0.0
  %518 = vmatpush2.msra.mxu0 0.0
  %519 = vmatprep.subr.mxu0 0.0
  %520 = vmatpush2.msra.mxu0 0.0
  %521 = vmatprep.subr.mxu0 0.0
  %522 = vmatpush2.msra.mxu0 0.0
  %523 = vmatprep.subr.mxu0 0.0
  %524 = vmatpush2.msra.mxu0 0.0
  %525 = vmatprep.subr.mxu0 0.0
  %526 = vmatpush2.msra.mxu0 0.0
  %527 = vmatprep.subr.mxu0 0.0
  %528 = vmatpush2.msra.mxu0 0.0
  %529 = vmatprep.subr.mxu0 0.0
  %530 = vmatpush2.msra.mxu0 0.0
  %531 = vmatprep.subr.mxu0 0.0
  %532 = vmatpush2.msra.mxu0 0.0
  %533 = vmatprep.subr.mxu0 0.0
  %534 = vmatpush2.msra.mxu0 0.0
  %535 = vmatprep.subr.mxu0 0.0
  %536 = vmatpush2.msra.mxu0 0.0
  %537 = vmatprep.subr.mxu0 0.0
  %538 = vmatpush2.msra.mxu0 0.0
  %539 = vmatprep.subr.mxu0 0.0
  %540 = vmatpush2.msra.mxu0 0.0
  %541 = vmatprep.subr.mxu0 0.0
  %542 = vmatpush2.msra.mxu0 0.0
  %543 = vmatprep.mubr.f32.mxu0 0.0
  %544 = vmatmul.mubr.f32.gmra.mxu0 %v477
  %v545 = vpop.f32.mrf.mxu0
  %v546 = vadd.f32 %v474, %v545
  %v547 = vpop.f32.mrf.mxu0
  %548 = vdwg.mxu0
  %549 = vst.msk [vmem:[%s13] sm:$0xff] %vm204, %v546
  // Predicated region
  $region54: #{tpu_custom_call.1} parent=0 // pred_check
    _
  $region55: #{tpu_custom_call.1} parent=0 // pred_check_branch
    %551 = sbr.rel (0) target = $region57
  $region56: #{tpu_custom_call.1} parent=0 // pred_region
    _
  $region57: #{tpu_custom_call.1} parent=0 // pred_fallthru
    _
  // Predicated region
  $region58: #{tpu_custom_call.1} parent=0 // pred_check
    _
  $region59: #{tpu_custom_call.1} parent=0 // pred_check_branch
    %553 = sbr.rel (0) target = $region61
  $region60: #{tpu_custom_call.1} parent=0 // pred_region
    _
  $region61: #{tpu_custom_call.1} parent=0 // pred_fallthru
    _

</llo_original>
